<compile_context>
chip_gen: v6e
topology: v6e:2x2x1
jax: 0.10.0
libtpu: 0.0.40
codegen_flags: <defaults>
</compile_context>

<pallas_src>
import math

import jax
import jax.numpy as jnp
from jax.experimental import pallas as pl
from jax.experimental.pallas import tpu as pltpu


def _round_up(x, m):
    return ((x + m - 1) // m) * m


def _cdiv(a, b):
    return (a + b - 1) // b


def _vmem_capacity_bytes():
    """Per-core VMEM capacity; conservative 64 MiB fallback (valid on v7x)."""
    try:
        return int(pltpu.get_tpu_info().vmem_capacity_bytes)
    except Exception:
        return 64 * 1024 * 1024


def _num_tensorcores():
    """Best-effort TensorCore count per device (2 on v7x, 1 on v5e/v6e)."""
    try:
        d = jax.devices()[0]
        return max(1, int(getattr(d, "num_cores", getattr(d, "core_count", 1))))
    except Exception:
        return 1


def mlp_kernel(x_ref, w1_ref, b1_ref, w2_ref, b2_ref, o_ref, acc_ref):
    j = pl.program_id(1)

    @pl.when(j == 0)
    def _():
        acc_ref[...] = jnp.zeros_like(acc_ref)

    # fc1 chunk: (TM, H) @ (H, TD) on the MXU, bf16 operands, f32 accumulation.
    h = jnp.dot(x_ref[...], w1_ref[...], preferred_element_type=jnp.float32)
    h = h + b1_ref[...]  # bias add in f32
    # tanh GELU -> EUP slot (otherwise idle) instead of a long erf VALU polynomial.
    h = jax.nn.gelu(h, approximate=True)
    # Dropout is identity in eval mode (inference kernel).
    # TODO(synk): training-mode dropout (pltpu.prng_random_bits mask) not implemented.

    # fc2 chunk: (TM, TD) @ (TD, H), accumulated in f32 VMEM scratch across D chunks.
    acc_ref[...] += jnp.dot(h.astype(w2_ref.dtype), w2_ref[...],
                            preferred_element_type=jnp.float32)

    @pl.when(j == pl.num_programs(1) - 1)
    def _():
        o_ref[...] = (acc_ref[...] + b2_ref[...]).astype(o_ref.dtype)


def _select_tiles(M, H_pad, D_pad, out_bytes, *, tile_m_max, tile_d_max):
    """Pick (tile_m, tile_d, M_pad) from the chip's real VMEM budget."""
    vmem_cap = _vmem_capacity_bytes()
    budget = int(0.8 * vmem_cap)  # ~20% headroom for compiler scratch / sems
    n_cores = _num_tensorcores()

    M8 = _round_up(max(M, 1), 8)

    def vmem_est(tm, td):
        return (
            2 * tm * H_pad * 2            # x tile (bf16), double-buffered
            + 2 * tm * H_pad * out_bytes  # output tile, double-buffered
            + tm * H_pad * 4              # f32 accumulator scratch (resident)
            + 2 * H_pad * td * 2          # w1 chunk (bf16), double-buffered
            + 2 * td * H_pad * 2          # w2 chunk (bf16), double-buffered
            + 2 * (td + H_pad) * 4        # biases (f32), double-buffered
        )

    tile_d = min(tile_d_max, D_pad)
    tile_m = min(tile_m_max, M8)

    # Shrink tile_m first (weights are re-streamed per token tile, but VMEM is
    # O(tile_m * H_pad) in three buffers), then tile_d, until the set fits.
    while vmem_est(tile_m, tile_d) > budget and tile_m > 8:
        tile_m = max(8, _round_up(tile_m // 2, 8))
    while vmem_est(tile_m, tile_d) > budget and tile_d > 128:
        tile_d = max(128, _round_up(tile_d // 2, 128))
    # TODO(synk): for very large H_pad (>=4k) on v7x, additionally tile the fc2
    # output H axis so tile_m doesn't have to shrink below the streaming ridge.

    # Multi-TensorCore chips (v7x): make sure the "parallel" token axis has at
    # least one tile per core when M is big enough to split.
    if n_cores > 1 and M8 >= 8 * n_cores:
        tile_m = min(tile_m, _round_up(_cdiv(M8, n_cores), 8))

    # Balance tiles to minimise last-tile padding waste (e.g. M=520 should not
    # pad to 1024): fix the tile count first, then use an even tile size.
    n_i = max(1, _cdiv(M8, tile_m))
    tile_m = _round_up(_cdiv(M8, n_i), 8)
    M_pad = n_i * tile_m

    return tile_m, tile_d, M_pad, vmem_est(tile_m, tile_d), vmem_cap


def prepare_mlp_params(w1, b1, w2, b2):
    """Pad/cast weights ONCE (hoisted out of the per-call path).

    w1: (hidden, mlp), b1: (mlp,) or (1, mlp), w2: (mlp, hidden), b2: (hidden,) or (1, hidden).
    """
    H, D = w1.shape
    H_pad = _round_up(H, 128)
    D_pad = _round_up(D, 128)
    b1 = jnp.asarray(b1).reshape(1, D).astype(jnp.float32)
    b2 = jnp.asarray(b2).reshape(1, H).astype(jnp.float32)
    if (H_pad, D_pad) == (H, D):
        w1_p = w1.astype(jnp.bfloat16)
        w2_p = w2.astype(jnp.bfloat16)
        b1_p = b1
        b2_p = b2
    else:
        # Padded bias entries must stay exactly zero so padded columns stay inert.
        w1_p = jnp.zeros((H_pad, D_pad), jnp.bfloat16).at[:H, :D].set(
            w1.astype(jnp.bfloat16))
        w2_p = jnp.zeros((D_pad, H_pad), jnp.bfloat16).at[:D, :H].set(
            w2.astype(jnp.bfloat16))
        b1_p = jnp.zeros((1, D_pad), jnp.float32).at[:, :D].set(b1)
        b2_p = jnp.zeros((1, H_pad), jnp.float32).at[:, :H].set(b2)
    return {"w1": w1_p, "b1": b1_p, "w2": w2_p, "b2": b2_p,
            "hidden": H, "mlp_dim": D}


def mlp_pallas(x, params, *, tile_m_max=1024, tile_d_max=512, out_dtype=None):
    """x: (M, hidden). params: output of prepare_mlp_params (already padded/cast)."""
    if out_dtype is None:
        out_dtype = x.dtype
    M, H = x.shape
    assert H == params["hidden"]
    w1_p, b1_p, w2_p, b2_p = params["w1"], params["b1"], params["w2"], params["b2"]
    H_pad, D_pad = w1_p.shape
    out_bytes = jnp.dtype(out_dtype).itemsize

    tile_m, tile_d, M_pad, vmem_est, vmem_cap = _select_tiles(
        M, H_pad, D_pad, out_bytes, tile_m_max=tile_m_max, tile_d_max=tile_d_max)

    # Only pad/copy x when actually needed.
    x_bf = x.astype(jnp.bfloat16)
    if (M_pad, H_pad) == (M, H):
        x_p = x_bf
    else:
        x_p = jnp.zeros((M_pad, H_pad), jnp.bfloat16).at[:M, :H].set(x_bf)

    grid = (M_pad // tile_m, D_pad // tile_d)
    n_i = grid[0]

    # vmem limit: at least 2x the estimated working set (pipelining slack), but
    # never above ~90% of the chip's real capacity (64 MiB on v7x, 128 on v5e/v6e).
    vmem_limit = int(min(max(2 * vmem_est, 32 * 1024 * 1024),
                         int(0.9 * vmem_cap)))

    cost = pl.CostEstimate(
        flops=2 * M_pad * (H_pad * D_pad + D_pad * H_pad),
        transcendentals=M_pad * D_pad,
        bytes_accessed=(x_p.size * 2
                        + n_i * (w1_p.size * 2 + w2_p.size * 2)  # re-streamed per i tile
                        + b1_p.size * 4 + b2_p.size * 4
                        + M_pad * H_pad * out_bytes),
    )

    out_p = pl.pallas_call(
        mlp_kernel,
        out_shape=jax.ShapeDtypeStruct((M_pad, H_pad), out_dtype),
        grid_spec=pltpu.PrefetchScalarGridSpec(
            num_scalar_prefetch=0,
            grid=grid,
            in_specs=[
                pl.BlockSpec((tile_m, H_pad), lambda i, j: (i, 0)),   # x tile
                pl.BlockSpec((H_pad, tile_d), lambda i, j: (0, j)),   # w1 chunk
                pl.BlockSpec((1, tile_d), lambda i, j: (0, j)),       # b1 chunk
                pl.BlockSpec((tile_d, H_pad), lambda i, j: (j, 0)),   # w2 chunk
                pl.BlockSpec((1, H_pad), lambda i, j: (0, 0)),        # b2
            ],
            out_specs=pl.BlockSpec((tile_m, H_pad), lambda i, j: (i, 0)),
            scratch_shapes=[pltpu.VMEM((tile_m, H_pad), jnp.float32)],
        ),
        compiler_params=pltpu.CompilerParams(
            dimension_semantics=("parallel", "arbitrary"),
            vmem_limit_bytes=vmem_limit,
        ),
        cost_estimate=cost,
    )(x_p, w1_p, b1_p, w2_p, b2_p)

    if (M_pad, H_pad) == (M, H):
        return out_p
    return out_p[:M, :H]


def xavier_uniform(key, fan_in, fan_out, dtype=jnp.float32):
    # matches torch.nn.init.xavier_uniform_ for a Linear weight (out, in)
    limit = math.sqrt(6.0 / (fan_in + fan_out))
    return jax.random.uniform(key, (fan_in, fan_out), dtype,
                              minval=-limit, maxval=limit)


if __name__ == "__main__":
    # config: hidden_size=32, mlp_dim=64, dropout_rate=0.1 (inactive in eval)
    batch, seq, hidden, mlp_dim = 2, 8, 32, 64

    key = jax.random.PRNGKey(0)
    kx, kw1, kb1, kw2, kb2 = jax.random.split(key, 5)

    x = jax.random.normal(kx, (batch, seq, hidden), dtype=jnp.float32)

    # Parameters (deterministic init mirroring Mlp._init_weights).
    # Stored as [in, out] (transposed relative to torch Linear.weight).
    w1 = xavier_uniform(kw1, hidden, mlp_dim)
    b1 = (1e-6 * jax.random.normal(kb1, (mlp_dim,))).astype(jnp.float32)
    w2 = xavier_uniform(kw2, mlp_dim, hidden)
    b2 = (1e-6 * jax.random.normal(kb2, (hidden,))).astype(jnp.float32)

    # Hoisted once: pad/cast weights & biases for the kernel.
    params = prepare_mlp_params(w1, b1, w2, b2)

    # Flatten (batch, seq) -> tokens for the kernel, reshape back after.
    x2d = x.reshape(batch * seq, hidden)
    out2d = mlp_pallas(x2d, params)
    out = out2d.reshape(batch, seq, hidden)
    jax.block_until_ready(out)

    # Reference check in plain f32 JAX against the exact-erf GELU reference;
    # tolerance loosened for bf16 matmul operands + tanh-GELU approximation.
    ref = jax.nn.gelu(x2d @ w1 + b1[None, :], approximate=False) @ w2 + b2[None, :]
    assert jnp.allclose(out2d, ref.astype(out2d.dtype), atol=3e-2, rtol=3e-2), \
        "mismatch vs reference"

    print("KERNEL_OK")
</pallas_src>

<mosaic_0001>
module attributes {stable_mosaic.version = 11 : i64} {
  func.func @mlp_kernel(%arg0: i32, %arg1: i32, %arg2: memref<16x128xbf16, #tpu.memory_space<vmem>>, %arg3: memref<128x128xbf16, #tpu.memory_space<vmem>>, %arg4: memref<1x128xf32, #tpu.memory_space<vmem>>, %arg5: memref<128x128xbf16, #tpu.memory_space<vmem>>, %arg6: memref<1x128xf32, #tpu.memory_space<vmem>>, %arg7: memref<16x128xf32, #tpu.memory_space<vmem>>, %arg8: memref<16x128xf32, #tpu.memory_space<vmem>>) attributes {dimension_semantics = [#tpu.dimension_semantics<parallel>, #tpu.dimension_semantics<arbitrary>], iteration_bounds = array<i64: 1, 1>, scalar_prefetch = 0 : i64, scratch_operands = 1 : i64, tpu.core_type = #tpu.core_type<tc>, window_params = [{transform_indices = @transform_0, window_bounds = array<i64: 16, 128>}, {transform_indices = @transform_1, window_bounds = array<i64: 128, 128>}, {transform_indices = @transform_2, window_bounds = array<i64: 1, 128>}, {transform_indices = @transform_3, window_bounds = array<i64: 128, 128>}, {pipeline_mode = #tpu.pipeline_mode<synchronous>, transform_indices = @transform_4, window_bounds = array<i64: 1, 128>}, {transform_indices = @transform_5, window_bounds = array<i64: 16, 128>}]} {
    %c0_i32 = arith.constant 0 : i32
    %0 = arith.cmpi eq, %arg1, %c0_i32 : i32
    %1 = arith.extui %0 : i1 to i32
    %c0_i32_0 = arith.constant 0 : i32
    %2 = arith.cmpi ne, %1, %c0_i32_0 : i32
    scf.if %2 {
      %cst_19 = arith.constant 0.000000e+00 : f32
      %31 = vector.broadcast %cst_19 : f32 to vector<16x128xf32>
      %c0_20 = arith.constant 0 : index
      %c0_21 = arith.constant 0 : index
      %32 = vector.load %arg8[%c0_20, %c0_21] : memref<16x128xf32, #tpu.memory_space<vmem>>, vector<16x128xf32>
      tpu.vector_store %arg8[%c0_20, %c0_21], %31 {strides = array<i32>} : memref<16x128xf32, #tpu.memory_space<vmem>>, vector<16x128xf32>,
    } else {
    }
    %c0 = arith.constant 0 : index
    %c0_1 = arith.constant 0 : index
    %3 = vector.load %arg2[%c0, %c0_1] : memref<16x128xbf16, #tpu.memory_space<vmem>>, vector<16x128xbf16>
    %c0_2 = arith.constant 0 : index
    %c0_3 = arith.constant 0 : index
    %4 = vector.load %arg3[%c0_2, %c0_3] : memref<128x128xbf16, #tpu.memory_space<vmem>>, vector<128x128xbf16>
    %cst = arith.constant dense<0.000000e+00> : vector<16x128xf32>
    %5 = tpu.matmul %3, %4, %cst {dimension_numbers = #tpu.dot_dimension_numbers<[1], [0], [0], [1], [0, 0, 1, 1], [], []>} : vector<16x128xbf16>, vector<128x128xbf16>, vector<16x128xf32> -> vector<16x128xf32>
    %c0_4 = arith.constant 0 : index
    %c0_5 = arith.constant 0 : index
    %6 = vector.load %arg4[%c0_4, %c0_5] : memref<1x128xf32, #tpu.memory_space<vmem>>, vector<1x128xf32>
    %7 = vector.broadcast %6 : vector<1x128xf32> to vector<16x128xf32>
    %8 = arith.addf %5, %7 : vector<16x128xf32>
    %9 = arith.mulf %8, %8 : vector<16x128xf32>
    %10 = arith.mulf %8, %9 : vector<16x128xf32>
    %cst_6 = arith.constant 4.471500e-02 : f32
    %11 = vector.broadcast %cst_6 : f32 to vector<16x128xf32>
    %12 = arith.mulf %11, %10 : vector<16x128xf32>
    %13 = arith.addf %8, %12 : vector<16x128xf32>
    %cst_7 = arith.constant 0.797884583 : f32
    %14 = vector.broadcast %cst_7 : f32 to vector<16x128xf32>
    %15 = arith.mulf %14, %13 : vector<16x128xf32>
    %16 = math.tanh %15 : vector<16x128xf32>
    %cst_8 = arith.constant 1.000000e+00 : f32
    %17 = vector.broadcast %cst_8 : f32 to vector<16x128xf32>
    %18 = arith.addf %17, %16 : vector<16x128xf32>
    %cst_9 = arith.constant 5.000000e-01 : f32
    %19 = vector.broadcast %cst_9 : f32 to vector<16x128xf32>
    %20 = arith.mulf %19, %18 : vector<16x128xf32>
    %21 = arith.mulf %8, %20 : vector<16x128xf32>
    %c0_10 = arith.constant 0 : index
    %c0_11 = arith.constant 0 : index
    %22 = vector.load %arg8[%c0_10, %c0_11] : memref<16x128xf32, #tpu.memory_space<vmem>>, vector<16x128xf32>
    %23 = arith.truncf %21 : vector<16x128xf32> to vector<16x128xbf16>
    %c0_12 = arith.constant 0 : index
    %c0_13 = arith.constant 0 : index
    %24 = vector.load %arg5[%c0_12, %c0_13] : memref<128x128xbf16, #tpu.memory_space<vmem>>, vector<128x128xbf16>
    %cst_14 = arith.constant dense<0.000000e+00> : vector<16x128xf32>
    %25 = tpu.matmul %23, %24, %cst_14 {dimension_numbers = #tpu.dot_dimension_numbers<[1], [0], [0], [1], [0, 0, 1, 1], [], []>} : vector<16x128xbf16>, vector<128x128xbf16>, vector<16x128xf32> -> vector<16x128xf32>
    %26 = arith.addf %22, %25 : vector<16x128xf32>
    %c0_15 = arith.constant 0 : index
    %c0_16 = arith.constant 0 : index
    %27 = vector.load %arg8[%c0_15, %c0_16] : memref<16x128xf32, #tpu.memory_space<vmem>>, vector<16x128xf32>
    tpu.vector_store %arg8[%c0_15, %c0_16], %26 {strides = array<i32>} : memref<16x128xf32, #tpu.memory_space<vmem>>, vector<16x128xf32>,
    %c0_i32_17 = arith.constant 0 : i32
    %28 = arith.cmpi eq, %arg1, %c0_i32_17 : i32
    %29 = arith.extui %28 : i1 to i32
    %c0_i32_18 = arith.constant 0 : i32
    %30 = arith.cmpi ne, %29, %c0_i32_18 : i32
    scf.if %30 {
      %c0_19 = arith.constant 0 : index
      %c0_20 = arith.constant 0 : index
      %31 = vector.load %arg8[%c0_19, %c0_20] : memref<16x128xf32, #tpu.memory_space<vmem>>, vector<16x128xf32>
      %c0_21 = arith.constant 0 : index
      %c0_22 = arith.constant 0 : index
      %32 = vector.load %arg6[%c0_21, %c0_22] : memref<1x128xf32, #tpu.memory_space<vmem>>, vector<1x128xf32>
      %33 = vector.broadcast %32 : vector<1x128xf32> to vector<16x128xf32>
      %34 = arith.addf %31, %33 : vector<16x128xf32>
      %c0_23 = arith.constant 0 : index
      %c0_24 = arith.constant 0 : index
      %35 = vector.load %arg7[%c0_23, %c0_24] : memref<16x128xf32, #tpu.memory_space<vmem>>, vector<16x128xf32>
      tpu.vector_store %arg7[%c0_23, %c0_24], %34 {strides = array<i32>} : memref<16x128xf32, #tpu.memory_space<vmem>>, vector<16x128xf32>,
    } else {
    }
    return
  }
  func.func @transform_0(%arg0: i32, %arg1: i32) -> (i32, i32) {
    %c0_i32 = arith.constant 0 : i32
    %c0_i32_0 = arith.constant 0 : i32
    return %arg0, %c0_i32 : i32, i32
  }
  func.func @transform_1(%arg0: i32, %arg1: i32) -> (i32, i32) {
    %c0_i32 = arith.constant 0 : i32
    %c0_i32_0 = arith.constant 0 : i32
    return %c0_i32, %arg1 : i32, i32
  }
  func.func @transform_2(%arg0: i32, %arg1: i32) -> (i32, i32) {
    %c0_i32 = arith.constant 0 : i32
    %c0_i32_0 = arith.constant 0 : i32
    return %c0_i32, %arg1 : i32, i32
  }
  func.func @transform_3(%arg0: i32, %arg1: i32) -> (i32, i32) {
    %c0_i32 = arith.constant 0 : i32
    %c0_i32_0 = arith.constant 0 : i32
    return %arg1, %c0_i32 : i32, i32
  }
  func.func @transform_4(%arg0: i32, %arg1: i32) -> (i32, i32) {
    %c0_i32 = arith.constant 0 : i32
    %c0_i32_0 = arith.constant 0 : i32
    %c0_i32_1 = arith.constant 0 : i32
    return %c0_i32, %c0_i32_0 : i32, i32
  }
  func.func @transform_5(%arg0: i32, %arg1: i32) -> (i32, i32) {
    %c0_i32 = arith.constant 0 : i32
    %c0_i32_0 = arith.constant 0 : i32
    return %arg0, %c0_i32 : i32, i32
  }
}

</mosaic_0001>

<llo_original>
// kernel: tpu_custom_call.1
$region0: #{tpu_custom_call.1}
  #allocation0 [shape = 'u32[]', space=smem, size = 0x4, offset = 0x4, fixed_abs, tag = 'smem constant byte address 0x4 - core index']
  #allocation1 [shape = 'u32[144,128]{1,0:T(1,128)}', space=vmem, size = 0x12000, scoped, tag = 'internal scratch']
  #allocation2 [shape = 'f32[16,128]{1,0:T(8,128)}', space=vmem, size = 0x2000, scoped, tag = 'scratch operand']
  %s0 = inlined_call_operand.hbm [shape: bf16[16,128], index: 0, kind: input, shape index: {}]
  %s1 = inlined_call_operand.hbm [shape: bf16[128,128], index: 1, kind: input, shape index: {}]
  %s2 = inlined_call_operand.vmem [shape: f32[1,128], index: 2, kind: input, shape index: {}]
  %s3 = inlined_call_operand.hbm [shape: bf16[128,128], index: 3, kind: input, shape index: {}]
  %s4 = inlined_call_operand.vmem [shape: f32[1,128], index: 4, kind: input, shape index: {}]
  %s5 = inlined_call_operand.hbm [shape: f32[16,128], index: 5, kind: output, shape index: {}]
  %s6 = sld [smem:[#allocation0]]
  $region50: #{tpu_custom_call.1} parent=0
    _
  %s8 = ssub.s32 1, %s6
  %s9 = scalar_select 0, %s8, %s6
  $region1: #{tpu_custom_call.1} parent=0
    #allocation3 [shape = 'u8[4096]{0}', space=vmem, size = 0x1000, scoped, tag = 'input window, operand 0, single buffered']
    #allocation4 [shape = 's32[1]{0}', space=sflag, size = 0x4, scoped, tag = 'scoped memory for tpu_custom_call.1']
    #allocation5 [shape = 's32[1]{0}', space=sflag, size = 0x4, scoped, tag = 'scoped memory for tpu_custom_call.1']
    #allocation6 [shape = 'u8[32768]{0}', space=vmem, size = 0x8000, scoped, tag = 'input window, operand 1, single buffered']
    #allocation7 [shape = 's32[1]{0}', space=sflag, size = 0x4, scoped, tag = 'scoped memory for tpu_custom_call.1']
    #allocation8 [shape = 'u8[32768]{0}', space=vmem, size = 0x8000, scoped, tag = 'input window, operand 3, single buffered']
    #allocation9 [shape = 'u8[8192]{0}', space=vmem, size = 0x2000, scoped, tag = 'output window, operand 0, single buffered']
    %10 = vsyncpa [#allocation4], 0
    %11 = vsyncpa [#allocation7], 0
    %12 = vsyncpa [#allocation5], 0
    // Predicated region
    $region2: #{tpu_custom_call.1} parent=1 // pred_check
      _
    $region3: #{tpu_custom_call.1} parent=1 // pred_check_branch
      %14 = sbr.rel (0) target = $region5
    $region4: #{tpu_custom_call.1} parent=1 // pred_region
      %s16 = ssub.s32 128, 128
      %17 = vsyncadd [#allocation4], %s16
      %s18 = sshll.u32 [#allocation3], 4
      %s19 = int_to_ptr.vmem [resolvable:$true] %s18
      %24 = dma.hbm_to_vmem [thread:$0]  %s0, 128, %s19, [#allocation4], 64, 64, 4
    $region5: #{tpu_custom_call.1} parent=1 // pred_fallthru
      _
    // Predicated region
    $region6: #{tpu_custom_call.1} parent=1 // pred_check
      _
    $region7: #{tpu_custom_call.1} parent=1 // pred_check_branch
      %26 = sbr.rel (0) target = $region9
    $region8: #{tpu_custom_call.1} parent=1 // pred_region
      %s28 = ssub.s32 1024, 1024
      %29 = vsyncadd [#allocation7], %s28
      %s30 = sshll.u32 [#allocation6], 4
      %s31 = int_to_ptr.vmem [resolvable:$true] %s30
      %36 = dma.hbm_to_vmem [thread:$0]  %s1, 1024, %s31, [#allocation7], 64, 64, 4
    $region9: #{tpu_custom_call.1} parent=1 // pred_fallthru
      _
    // Predicated region
    $region10: #{tpu_custom_call.1} parent=1 // pred_check
      _
    $region11: #{tpu_custom_call.1} parent=1 // pred_check_branch
      %38 = sbr.rel (0) target = $region13
    $region12: #{tpu_custom_call.1} parent=1 // pred_region
      _
    $region13: #{tpu_custom_call.1} parent=1 // pred_fallthru
      _
    // Predicated region
    $region14: #{tpu_custom_call.1} parent=1 // pred_check
      _
    $region15: #{tpu_custom_call.1} parent=1 // pred_check_branch
      %40 = sbr.rel (0) target = $region17
    $region16: #{tpu_custom_call.1} parent=1 // pred_region
      %s42 = ssub.s32 1024, 1024
      %43 = vsyncadd [#allocation7], %s42
      %s44 = sshll.u32 [#allocation8], 4
      %s45 = int_to_ptr.vmem [resolvable:$true] %s44
      %50 = dma.hbm_to_vmem [thread:$0]  %s3, 1024, %s45, [#allocation7], 64, 64, 4
    $region17: #{tpu_custom_call.1} parent=1 // pred_fallthru
      _
    // Predicated region
    $region18: #{tpu_custom_call.1} parent=1 // pred_check
      _
    $region19: #{tpu_custom_call.1} parent=1 // pred_check_branch
      %52 = sbr.rel (0) target = $region21
    $region20: #{tpu_custom_call.1} parent=1 // pred_region
      _
    $region21: #{tpu_custom_call.1} parent=1 // pred_fallthru
      _
    // Predicated region
    $region22: #{tpu_custom_call.1} parent=1 // pred_check
      _
    $region23: #{tpu_custom_call.1} parent=1 // pred_check_branch
      %54 = sbr.rel (0) target = $region25
    $region24: #{tpu_custom_call.1} parent=1 // pred_region
      %55 = dma.done [#allocation4], 128
    $region25: #{tpu_custom_call.1} parent=1 // pred_fallthru
      _
    // Predicated region
    $region26: #{tpu_custom_call.1} parent=1 // pred_check
      _
    $region27: #{tpu_custom_call.1} parent=1 // pred_check_branch
      %57 = sbr.rel (0) target = $region29
    $region28: #{tpu_custom_call.1} parent=1 // pred_region
      %58 = dma.done [#allocation7], 1024
    $region29: #{tpu_custom_call.1} parent=1 // pred_fallthru
      _
    // Predicated region
    $region30: #{tpu_custom_call.1} parent=1 // pred_check
      _
    $region31: #{tpu_custom_call.1} parent=1 // pred_check_branch
      %60 = sbr.rel (0) target = $region33
    $region32: #{tpu_custom_call.1} parent=1 // pred_region
      %61 = dma.done [#allocation7], 1024
    $region33: #{tpu_custom_call.1} parent=1 // pred_fallthru
      _
    %p63 = scmp.eq.s32.totalorder 0, 0
    // Predicated region
    $region34: #{tpu_custom_call.1} parent=1 // pred_check
      %p64 = pneg %p63
    $region35: #{tpu_custom_call.1} parent=1 // pred_check_branch
      %66 = sbr.rel (%p64) target = $region37
    $region36: #{tpu_custom_call.1} parent=1 // pred_region
      %67 = vst [vmem:[#allocation2] sm:$0xff] 0.0
      %68 = vst [vmem:[#allocation2 + $0x8] sm:$0xff] 0.0
    $region37: #{tpu_custom_call.1} parent=1 // pred_fallthru
      _
    %v69 = vld [vmem:[#allocation3] sm:$0xf]
    %v70 = vld [vmem:[#allocation3 + $0x4] sm:$0xf]
    %v71 = vld [vmem:[#allocation6] sm:$0xf]
    %v72 = vld [vmem:[#allocation6 + $0x4] sm:$0xf]
    %v73 = vld [vmem:[#allocation6 + $0x8] sm:$0xf]
    %v74 = vld [vmem:[#allocation6 + $0xc] sm:$0xf]
    %v75 = vld [vmem:[#allocation6 + $0x10] sm:$0xf]
    %v76 = vld [vmem:[#allocation6 + $0x14] sm:$0xf]
    %v77 = vld [vmem:[#allocation6 + $0x18] sm:$0xf]
    %v78 = vld [vmem:[#allocation6 + $0x1c] sm:$0xf]
    %v79 = vld [vmem:[#allocation6 + $0x20] sm:$0xf]
    %v80 = vld [vmem:[#allocation6 + $0x24] sm:$0xf]
    %v81 = vld [vmem:[#allocation6 + $0x28] sm:$0xf]
    %v82 = vld [vmem:[#allocation6 + $0x2c] sm:$0xf]
    %v83 = vld [vmem:[#allocation6 + $0x30] sm:$0xf]
    %v84 = vld [vmem:[#allocation6 + $0x34] sm:$0xf]
    %v85 = vld [vmem:[#allocation6 + $0x38] sm:$0xf]
    %v86 = vld [vmem:[#allocation6 + $0x3c] sm:$0xf]
    %v87 = vld [vmem:[%s2] sm:$0x1]
    %v89 = vlaneseq
    %v90 = vshrl.u32 %v89, 7
    %v91 = vsub.s32 0, %v90
    %v92 = vrot.slane %v87, %v91
    %v96 = vunpack.c.l.b16 %v69
    %v97 = vunpack.c.l.b16 %v70
    %v98 = vpack.c.b16 %v97, %v96
    %v116 = vunpack.c.l.b16 %v71
    %v117 = vunpack.c.l.b16 %v72
    %v118 = vunpack.c.l.b16 %v73
    %v119 = vunpack.c.l.b16 %v74
    %v120 = vunpack.c.l.b16 %v75
    %v121 = vunpack.c.l.b16 %v76
    %v122 = vunpack.c.l.b16 %v77
    %v123 = vunpack.c.l.b16 %v78
    %v124 = vunpack.c.l.b16 %v79
    %v125 = vunpack.c.l.b16 %v80
    %v126 = vunpack.c.l.b16 %v81
    %v127 = vunpack.c.l.b16 %v82
    %v128 = vunpack.c.l.b16 %v83
    %v129 = vunpack.c.l.b16 %v84
    %v130 = vunpack.c.l.b16 %v85
    %v131 = vunpack.c.l.b16 %v86
    %v132 = vpack.c.b16 %v117, %v116
    %v133 = vpack.c.b16 %v119, %v118
    %v134 = vpack.c.b16 %v121, %v120
    %v135 = vpack.c.b16 %v123, %v122
    %v136 = vpack.c.b16 %v125, %v124
    %v137 = vpack.c.b16 %v127, %v126
    %v138 = vpack.c.b16 %v129, %v128
    %v139 = vpack.c.b16 %v131, %v130
    %148 = vmatprep.subr.bf16.mxu0 0
    %149 = vmatpush1.bf16.msra.mxu0 %v139
    %150 = vmatprep.subr.bf16.mxu0 0
    %151 = vmatpush1.bf16.msra.mxu0 %v138
    %152 = vmatprep.subr.bf16.mxu0 0
    %153 = vmatpush1.bf16.msra.mxu0 %v137
    %154 = vmatprep.subr.bf16.mxu0 0
    %155 = vmatpush1.bf16.msra.mxu0 %v136
    %156 = vmatprep.subr.bf16.mxu0 0
    %157 = vmatpush1.bf16.msra.mxu0 %v135
    %158 = vmatprep.subr.bf16.mxu0 0
    %159 = vmatpush1.bf16.msra.mxu0 %v134
    %160 = vmatprep.subr.bf16.mxu0 0
    %161 = vmatpush1.bf16.msra.mxu0 %v133
    %162 = vmatprep.subr.bf16.mxu0 0
    %163 = vmatpush1.bf16.msra.mxu0 %v132
    %164 = vmatprep.subr.bf16.mxu0 0
    %165 = vmatpush2.bf16.msra.mxu0 0
    %166 = vmatprep.subr.bf16.mxu0 0
    %167 = vmatpush2.bf16.msra.mxu0 0
    %168 = vmatprep.subr.bf16.mxu0 0
    %169 = vmatpush2.bf16.msra.mxu0 0
    %170 = vmatprep.subr.bf16.mxu0 0
    %171 = vmatpush2.bf16.msra.mxu0 0
    %172 = vmatprep.subr.bf16.mxu0 0
    %173 = vmatpush2.bf16.msra.mxu0 0
    %174 = vmatprep.subr.bf16.mxu0 0
    %175 = vmatpush2.bf16.msra.mxu0 0
    %176 = vmatprep.subr.bf16.mxu0 0
    %177 = vmatpush2.bf16.msra.mxu0 0
    %178 = vmatprep.subr.bf16.mxu0 0
    %179 = vmatpush2.bf16.msra.mxu0 0
    %180 = vmatprep.mubr.bf16.mxu0 0
    %181 = vmatmul.mubr.bf16.gmra.mxu0 %v98
    %v182 = vpop.f32.mrf.mxu0
    %v183 = vadd.f32 %v92, %v182
    %v184 = vpop.f32.mrf.mxu0
    %v185 = vpop.f32.mrf.mxu0
    %v186 = vadd.f32 %v92, %v185
    %v187 = vpop.f32.mrf.mxu0
    %188 = vdwg.mxu0
    %v189 = vmul.f32 %v183, %v183
    %v190 = vmul.f32 %v186, %v186
    %v191 = vmul.f32 %v183, %v189
    %v192 = vmul.f32 %v186, %v190
    %v193 = vmul.f32 %v191, 0.044715
    %v194 = vmul.f32 %v192, 0.044715
    %v195 = vadd.f32 %v183, %v193
    %v196 = vadd.f32 %v186, %v194
    %v197 = vmul.f32 %v195, 0.7978846
    %v198 = vmul.f32 %v196, 0.7978846
    %v199 = vtanh.pop %v197
    %v200 = vtanh.pop %v198
    %v201 = vadd.f32 %v199, 1.0
    %v202 = vadd.f32 %v200, 1.0
    %v203 = vmul.f32 %v201, 0.5
    %v204 = vmul.f32 %v202, 0.5
    %v205 = vmul.f32 %v183, %v203
    %v206 = vmul.f32 %v186, %v204
    %v207 = vld [vmem:[#allocation2] sm:$0xff]
    %v208 = vld [vmem:[#allocation2 + $0x8] sm:$0xff]
    %v209 = vpack.c.bf16 %v206, %v205
    %v210 = vld [vmem:[#allocation8] sm:$0xf]
    %v211 = vld [vmem:[#allocation8 + $0x4] sm:$0xf]
    %v212 = vld [vmem:[#allocation8 + $0x8] sm:$0xf]
    %v213 = vld [vmem:[#allocation8 + $0xc] sm:$0xf]
    %v214 = vld [vmem:[#allocation8 + $0x10] sm:$0xf]
    %v215 = vld [vmem:[#allocation8 + $0x14] sm:$0xf]
    %v216 = vld [vmem:[#allocation8 + $0x18] sm:$0xf]
    %v217 = vld [vmem:[#allocation8 + $0x1c] sm:$0xf]
    %v218 = vld [vmem:[#allocation8 + $0x20] sm:$0xf]
    %v219 = vld [vmem:[#allocation8 + $0x24] sm:$0xf]
    %v220 = vld [vmem:[#allocation8 + $0x28] sm:$0xf]
    %v221 = vld [vmem:[#allocation8 + $0x2c] sm:$0xf]
    %v222 = vld [vmem:[#allocation8 + $0x30] sm:$0xf]
    %v223 = vld [vmem:[#allocation8 + $0x34] sm:$0xf]
    %v224 = vld [vmem:[#allocation8 + $0x38] sm:$0xf]
    %v225 = vld [vmem:[#allocation8 + $0x3c] sm:$0xf]
    %v242 = vunpack.c.l.b16 %v210
    %v243 = vunpack.c.l.b16 %v211
    %v244 = vunpack.c.l.b16 %v212
    %v245 = vunpack.c.l.b16 %v213
    %v246 = vunpack.c.l.b16 %v214
    %v247 = vunpack.c.l.b16 %v215
    %v248 = vunpack.c.l.b16 %v216
    %v249 = vunpack.c.l.b16 %v217
    %v250 = vunpack.c.l.b16 %v218
    %v251 = vunpack.c.l.b16 %v219
    %v252 = vunpack.c.l.b16 %v220
    %v253 = vunpack.c.l.b16 %v221
    %v254 = vunpack.c.l.b16 %v222
    %v255 = vunpack.c.l.b16 %v223
    %v256 = vunpack.c.l.b16 %v224
    %v257 = vunpack.c.l.b16 %v225
    %v258 = vpack.c.b16 %v243, %v242
    %v259 = vpack.c.b16 %v245, %v244
    %v260 = vpack.c.b16 %v247, %v246
    %v261 = vpack.c.b16 %v249, %v248
    %v262 = vpack.c.b16 %v251, %v250
    %v263 = vpack.c.b16 %v253, %v252
    %v264 = vpack.c.b16 %v255, %v254
    %v265 = vpack.c.b16 %v257, %v256
    %274 = vmatprep.subr.bf16.mxu0 0
    %275 = vmatpush1.bf16.msra.mxu0 %v265
    %276 = vmatprep.subr.bf16.mxu0 0
    %277 = vmatpush1.bf16.msra.mxu0 %v264
    %278 = vmatprep.subr.bf16.mxu0 0
    %279 = vmatpush1.bf16.msra.mxu0 %v263
    %280 = vmatprep.subr.bf16.mxu0 0
    %281 = vmatpush1.bf16.msra.mxu0 %v262
    %282 = vmatprep.subr.bf16.mxu0 0
    %283 = vmatpush1.bf16.msra.mxu0 %v261
    %284 = vmatprep.subr.bf16.mxu0 0
    %285 = vmatpush1.bf16.msra.mxu0 %v260
    %286 = vmatprep.subr.bf16.mxu0 0
    %287 = vmatpush1.bf16.msra.mxu0 %v259
    %288 = vmatprep.subr.bf16.mxu0 0
    %289 = vmatpush1.bf16.msra.mxu0 %v258
    %290 = vmatprep.subr.bf16.mxu0 0
    %291 = vmatpush2.bf16.msra.mxu0 0
    %292 = vmatprep.subr.bf16.mxu0 0
    %293 = vmatpush2.bf16.msra.mxu0 0
    %294 = vmatprep.subr.bf16.mxu0 0
    %295 = vmatpush2.bf16.msra.mxu0 0
    %296 = vmatprep.subr.bf16.mxu0 0
    %297 = vmatpush2.bf16.msra.mxu0 0
    %298 = vmatprep.subr.bf16.mxu0 0
    %299 = vmatpush2.bf16.msra.mxu0 0
    %300 = vmatprep.subr.bf16.mxu0 0
    %301 = vmatpush2.bf16.msra.mxu0 0
    %302 = vmatprep.subr.bf16.mxu0 0
    %303 = vmatpush2.bf16.msra.mxu0 0
    %304 = vmatprep.subr.bf16.mxu0 0
    %305 = vmatpush2.bf16.msra.mxu0 0
    %306 = vmatprep.mubr.bf16.mxu0 0
    %307 = vmatmul.mubr.bf16.gmra.mxu0 %v209
    %v308 = vpop.f32.mrf.mxu0
    %v309 = vadd.f32 0.0, %v308
    %v310 = vpop.f32.mrf.mxu0
    %v311 = vpop.f32.mrf.mxu0
    %v312 = vadd.f32 0.0, %v311
    %v313 = vpop.f32.mrf.mxu0
    %314 = vdwg.mxu0
    %v315 = vadd.f32 %v207, %v309
    %v316 = vadd.f32 %v208, %v312
    %317 = vst [vmem:[#allocation2] sm:$0xff] %v315
    %318 = vst [vmem:[#allocation2 + $0x8] sm:$0xff] %v316
    // Predicated region
    $region38: #{tpu_custom_call.1} parent=1 // pred_check
      %p319 = pneg %p63
    $region39: #{tpu_custom_call.1} parent=1 // pred_check_branch
      %321 = sbr.rel (%p319) target = $region41
    $region40: #{tpu_custom_call.1} parent=1 // pred_region
      %v322 = vld [vmem:[#allocation2] sm:$0xff]
      %v323 = vld [vmem:[#allocation2 + $0x8] sm:$0xff]
      %v324 = vld [vmem:[%s4] sm:$0x1]
      %v326 = vlaneseq
      %v327 = vshrl.u32 %v326, 7
      %v328 = vsub.s32 0, %v327
      %v329 = vrot.slane %v324, %v328
      %v331 = vadd.f32 %v322, %v329
      %v332 = vadd.f32 %v323, %v329
      %333 = vst [vmem:[#allocation9] sm:$0xff] %v331
      %334 = vst [vmem:[#allocation9 + $0x8] sm:$0xff] %v332
    $region41: #{tpu_custom_call.1} parent=1 // pred_fallthru
      _
    // Predicated region
    $region42: #{tpu_custom_call.1} parent=1 // pred_check
      _
    $region43: #{tpu_custom_call.1} parent=1 // pred_check_branch
      %336 = sbr.rel (0) target = $region45
    $region44: #{tpu_custom_call.1} parent=1 // pred_region
      %s338 = ssub.s32 256, 256
      %339 = vsyncadd [#allocation5], %s338
      %s340 = sshll.u32 [#allocation9], 4
      %s341 = int_to_ptr.vmem [resolvable:$true] %s340
      %346 = dma.vmem_to_hbm [thread:$0]  %s341, 256, %s5, [#allocation5], 128, 128, 8
    $region45: #{tpu_custom_call.1} parent=1 // pred_fallthru
      _
    // Predicated region
    $region46: #{tpu_custom_call.1} parent=1 // pred_check
      _
    $region47: #{tpu_custom_call.1} parent=1 // pred_check_branch
      %348 = sbr.rel (0) target = $region49
    $region48: #{tpu_custom_call.1} parent=1 // pred_region
      %349 = dma.done [#allocation5], 256
    $region49: #{tpu_custom_call.1} parent=1 // pred_fallthru
      _
    %350 = vsyncpa [#allocation4], 1
    %351 = vsyncpa [#allocation7], 1
    %352 = vsyncpa [#allocation5], 1

</llo_original>
